<compile_context>
chip_gen: v7x
topology: tpu7x:2x2x1
jax: 0.10.0
libtpu: 0.0.40
codegen_flags: <defaults>
</compile_context>

<pallas_src>
import functools

import numpy as np
import jax
import jax.numpy as jnp
from jax.experimental import pallas as pl
from jax.experimental.pallas import tpu as pltpu


def _round_up(x, m):
    return ((x + m - 1) // m) * m


# ----------------------------------------------------------------------------
# Kernel
# ----------------------------------------------------------------------------
def _make_kernel(n_hidden, fused_widths, q_width, activation, negative_slope,
                 compute_dtype):
    """Kernel: n_hidden fused hidden layers + fused q layer, one tile of batch.

    Ref order: x, w_0, w_1, ..., w_{n_hidden-1}, w_q, bias_slab, out.
      x:         (tb, din+da)                       f32 (cast once to compute_dtype)
      w_i:       fused (block-diagonal) weights     compute_dtype
      bias_slab: (n_layers, Wmax)                   f32
      out:       (tb, 128)                          out dtype (lane c = critic c's q)
    """
    if activation == "relu":
        def act(x):
            return jnp.maximum(x, 0.0)
    elif activation == "leaky_relu":
        def act(x):
            return jnp.where(x >= 0.0, x, negative_slope * x)
    else:
        raise ValueError("Unknown activation function " + str(activation))

    def kernel(x_ref, *refs):
        w_refs = refs[:n_hidden + 1]          # w0, mid..., wq (fused)
        bias_ref = refs[n_hidden + 1]         # (n_layers, Wmax) f32
        out_ref = refs[-1]                    # (tb, 128)

        h = x_ref[...].astype(compute_dtype)
        for li in range(n_hidden):
            h = jnp.dot(h, w_refs[li][...],
                        preferred_element_type=jnp.float32)
            # Bias-add + activation in f32 (v5e-friendly).
            # TODO(synk): optional bf16 bias/act path for v6e/v7x would save
            # one f32->bf16 cast pass per layer.
            h = act(h + bias_ref[li:li + 1, 0:fused_widths[li]])
            h = h.astype(compute_dtype)
        q = jnp.dot(h, w_refs[n_hidden][...],
                    preferred_element_type=jnp.float32)
        out_ref[...] = (q + bias_ref[n_hidden:n_hidden + 1, 0:q_width]
                        ).astype(out_ref.dtype)

    return kernel


# ----------------------------------------------------------------------------
# Parameter packing (done once, outside the forward hot path)
# ----------------------------------------------------------------------------
def pack_td3_critic_params(per_critic_params, input_dims, n_actions,
                           compute_dtype=jnp.float32):
    """Pack one or more critics into fused, lane-padded, block-diagonal slabs.

    per_critic_params: list over critics of (weights, biases) where
      weights[i]: (in_features, out_features) f32   (hidden..., q)
      biases[i]:  (1, out_features) or (out_features,) f32
    Zero-padding of unused rows/cols/lanes guarantees exact results.
    """
    n_critics = len(per_critic_params)
    w_list0, _ = per_critic_params[0]
    n_layers = len(w_list0)
    assert n_layers >= 2, "need at least one hidden layer (C_fc_dims_list)"
    # TODO(synk): C_fc_dims_list=None (q directly on the concat input) is not
    # handled by this packer.
    n_hidden = n_layers - 1
    din_total = input_dims + n_actions

    hidden_outs = [w_list0[i].shape[1] for i in range(n_hidden)]
    h_pads = [_round_up(h, 128) for h in hidden_outs]      # per-critic lane pad
    fused_widths = [n_critics * p for p in h_pads]         # fused hidden widths
    q_width = 128                                          # critic c -> lane c
    assert n_critics <= q_width
    w_max = max(fused_widths + [q_width])

    fused_ws = []
    # Layer 0: critics stacked along output lanes.
    W0 = np.zeros((din_total, fused_widths[0]), np.float32)
    for c, (ws, _) in enumerate(per_critic_params):
        assert ws[0].shape == (din_total, hidden_outs[0])
        W0[:, c * h_pads[0]: c * h_pads[0] + hidden_outs[0]] = np.asarray(ws[0])
    fused_ws.append(W0)
    # Hidden layers 1..n_hidden-1: block-diagonal per critic.
    for li in range(1, n_hidden):
        W = np.zeros((fused_widths[li - 1], fused_widths[li]), np.float32)
        for c, (ws, _) in enumerate(per_critic_params):
            r0 = c * h_pads[li - 1]
            c0 = c * h_pads[li]
            W[r0:r0 + hidden_outs[li - 1],
              c0:c0 + hidden_outs[li]] = np.asarray(ws[li])
        fused_ws.append(W)
    # q layer: critic c's q column in lane c.
    Wq = np.zeros((fused_widths[-1], q_width), np.float32)
    for c, (ws, _) in enumerate(per_critic_params):
        r0 = c * h_pads[-1]
        Wq[r0:r0 + hidden_outs[-1], c:c + 1] = np.asarray(ws[-1])
    fused_ws.append(Wq)
    # Bias slab (n_layers, Wmax), f32.
    bias = np.zeros((n_layers, w_max), np.float32)
    for c, (_, bs) in enumerate(per_critic_params):
        for li in range(n_hidden):
            b = np.asarray(bs[li]).reshape(-1)
            bias[li, c * h_pads[li]: c * h_pads[li] + b.shape[0]] = b
        bias[n_hidden, c] = float(np.asarray(bs[-1]).reshape(-1)[0])

    arrays = {
        "weights": tuple(jnp.asarray(w, compute_dtype) for w in fused_ws),
        "bias": jnp.asarray(bias, jnp.float32),
    }
    meta = {
        "n_hidden": n_hidden,
        "n_critics": n_critics,
        "fused_widths": tuple(fused_widths),
        "q_width": q_width,
        "input_dims": input_dims,
        "n_actions": n_actions,
        "compute_dtype": compute_dtype,
    }
    return arrays, meta


# ----------------------------------------------------------------------------
# Forward wrapper
# ----------------------------------------------------------------------------
def td3_critic_forward(state, action, arrays, meta, *, activation="relu",
                       negative_slope=0.1, out_dtype=jnp.float32,
                       return_padded=False):
    """Fused forward of n_critics TD3 critic networks.

    Default return: (n_critics, B, 1) float32 state-action values.
    return_padded=True: raw (B_pad, 128) slab — rows < B and lanes < n_critics
    are valid, the rest is padding (consumer must mask/ignore it).
    """
    B, din = state.shape
    _, da = action.shape
    assert din == meta["input_dims"] and da == meta["n_actions"]

    n_hidden = meta["n_hidden"]
    n_critics = meta["n_critics"]
    fused_widths = meta["fused_widths"]
    q_width = meta["q_width"]
    cdt = meta["compute_dtype"]

    # One-time wrapper-level concat (HBM); no in-kernel concat, no K=4 dot.
    x = jnp.concatenate([state.astype(jnp.float32),
                         action.astype(jnp.float32)], axis=1)

    # Batch tiling: tiny batch -> single tile; otherwise split into >= 2 tiles
    # (so v7x's second TensorCore gets work), capped at 1024 rows/tile.
    if B < 64:
        tb = _round_up(B, 8)
    else:
        tb = min(1024, _round_up(pl.cdiv(B, 2), 8))
    bp = _round_up(B, tb)
    if bp != B:
        x = jnp.pad(x, ((0, bp - B), (0, 0)))

    kernel = _make_kernel(n_hidden, fused_widths, q_width, activation,
                          negative_slope, cdt)

    weight_args = tuple(arrays["weights"]) + (arrays["bias"],)
    in_specs = [pl.BlockSpec((tb, x.shape[1]), lambda i: (i, 0))]  # streamed
    for arr in weight_args:                                        # resident
        in_specs.append(pl.BlockSpec(arr.shape, lambda i: (0, 0)))
    out_spec = pl.BlockSpec((tb, q_width), lambda i: (i, 0))

    out = pl.pallas_call(
        kernel,
        out_shape=jax.ShapeDtypeStruct((bp, q_width), out_dtype),
        grid=(bp // tb,),
        in_specs=in_specs,
        out_specs=out_spec,
        compiler_params=pltpu.CompilerParams(
            dimension_semantics=("parallel",)),
    )(x, *weight_args)

    if return_padded:
        return out
    q = out[:B, :n_critics].astype(jnp.float32)   # (B, n_critics)
    return jnp.transpose(q)[:, :, None]           # (n_critics, B, 1)


# ----------------------------------------------------------------------------
# Parameter init mirroring the PyTorch module's __init__
# ----------------------------------------------------------------------------
def init_td3_critic_params(key, input_dims, n_actions, fc_dims,
                           init_type="kaiming", activation="relu"):
    """Returns (weights, biases): weights (in,out), biases (1,out), f32."""
    state_size = input_dims + n_actions
    layer_dims = []
    last = state_size
    for h in fc_dims:
        layer_dims.append((last, h))
        last = h
    layer_dims.append((last, 1))  # q layer

    weights, biases = [], []
    for idx, (fan_in, fan_out) in enumerate(layer_dims):
        key, kw, kb = jax.random.split(key, 3)
        if init_type == "kaiming":
            gain = jnp.sqrt(2.0) if activation == "relu" else jnp.sqrt(
                2.0 / (1.0 + 0.1 ** 2))
            w = gain / jnp.sqrt(fan_in) * jax.random.normal(
                kw, (fan_in, fan_out), jnp.float32)
            bias_ini = 1.0 / jnp.sqrt(jnp.float32(fan_out))
            b = jax.random.uniform(kb, (1, fan_out), jnp.float32,
                                   -bias_ini, bias_ini)
        elif init_type == "phil_tabor":
            f3 = 0.003
            is_q = idx == len(layer_dims) - 1
            if is_q:
                w = jax.random.uniform(kw, (fan_in, fan_out), jnp.float32,
                                       -f3, f3)
                b = jax.random.uniform(kb, (1, fan_out), jnp.float32, -f3, f3)
            else:
                bias_ini = 1.0 / jnp.sqrt(jnp.float32(fan_out))
                w = jax.random.uniform(kw, (fan_in, fan_out), jnp.float32,
                                       -bias_ini, bias_ini)
                b = jax.random.uniform(kb, (1, fan_out), jnp.float32,
                                       -bias_ini, bias_ini)
        else:
            raise ValueError("Unknown init_type " + str(init_type))
        weights.append(w)
        biases.append(b)
    return weights, biases


# ----------------------------------------------------------------------------
# Plain-JAX reference (single critic)
# ----------------------------------------------------------------------------
def reference_forward(state, action, weights, biases, activation="relu",
                      negative_slope=0.1, compute_dtype=jnp.float32):
    x = jnp.concatenate([state, action], axis=1)
    for i in range(len(weights) - 1):
        h = jnp.dot(x.astype(compute_dtype), weights[i].astype(compute_dtype),
                    preferred_element_type=jnp.float32) + biases[i]
        if activation == "relu":
            x = jnp.maximum(h, 0.0)
        elif activation == "leaky_relu":
            x = jnp.where(h >= 0.0, h, negative_slope * h)
        else:
            raise ValueError("Unknown activation " + str(activation))
    return jnp.dot(x.astype(compute_dtype), weights[-1].astype(compute_dtype),
                   preferred_element_type=jnp.float32) + biases[-1]


# TODO(synk): optimizer (Adam w/ weight decay) and device placement from the
# PyTorch module are training-state concerns, not part of the forward kernel.

if __name__ == "__main__":
    input_dims = 16
    n_actions = 4
    fc_dims = [32, 32]

    key = jax.random.PRNGKey(0)
    key, k1, k2 = jax.random.split(key, 3)
    # Two critics, as in TD3 (fused into one pallas_call / one dot chain).
    critic1 = init_td3_critic_params(k1, input_dims, n_actions, fc_dims,
                                     init_type="kaiming", activation="relu")
    critic2 = init_td3_critic_params(k2, input_dims, n_actions, fc_dims,
                                     init_type="kaiming", activation="relu")
    critics = [critic1, critic2]

    # ---- small batch, float32 MXU inputs, relu ------------------------------
    batch = 4
    key, ks, ka = jax.random.split(key, 3)
    state = jax.random.normal(ks, (batch, input_dims), jnp.float32)
    action = jax.random.normal(ka, (batch, n_actions), jnp.float32)
    refs_f32 = [reference_forward(state, action, w, b, activation="relu")
                for (w, b) in critics]

    arrays_f32, meta_f32 = pack_td3_critic_params(
        critics, input_dims, n_actions, compute_dtype=jnp.float32)
    fwd_f32 = jax.jit(functools.partial(
        td3_critic_forward, meta=meta_f32, activation="relu"))
    q_f32 = jax.block_until_ready(fwd_f32(state, action, arrays_f32))
    assert q_f32.shape == (2, batch, 1)
    for c in range(2):
        assert jnp.allclose(q_f32[c], refs_f32[c], atol=1e-4, rtol=1e-4)

    # ---- leaky_relu path (same params, slope=0.1 as in the PyTorch forward) -
    refs_lrelu = [reference_forward(state, action, w, b,
                                    activation="leaky_relu")
                  for (w, b) in critics]
    fwd_lrelu = jax.jit(functools.partial(
        td3_critic_forward, meta=meta_f32, activation="leaky_relu"))
    q_lrelu = jax.block_until_ready(fwd_lrelu(state, action, arrays_f32))
    for c in range(2):
        assert jnp.allclose(q_lrelu[c], refs_lrelu[c], atol=1e-4, rtol=1e-4)

    # ---- medium batch (non-multiple of tile) -> grid=(2,), padded rows ------
    batch2 = 100
    key, ks2, ka2 = jax.random.split(key, 3)
    state2 = jax.random.normal(ks2, (batch2, input_dims), jnp.float32)
    action2 = jax.random.normal(ka2, (batch2, n_actions), jnp.float32)
    refs2 = [reference_forward(state2, action2, w, b, activation="relu")
             for (w, b) in critics]
    q2 = jax.block_until_ready(fwd_f32(state2, action2, arrays_f32))
    assert q2.shape == (2, batch2, 1)
    for c in range(2):
        assert jnp.allclose(q2[c], refs2[c], atol=1e-4, rtol=1e-4)

    # ---- bfloat16 MXU-input path (f32 accumulation, f32 bias/activation) ----
    arrays_bf16, meta_bf16 = pack_td3_critic_params(
        critics, input_dims, n_actions, compute_dtype=jnp.bfloat16)
    fwd_bf16 = jax.jit(functools.partial(
        td3_critic_forward, meta=meta_bf16, activation="relu"))
    q_bf16 = jax.block_until_ready(fwd_bf16(state, action, arrays_bf16))
    refs_bf16 = [reference_forward(state, action, w, b, activation="relu",
                                   compute_dtype=jnp.bfloat16)
                 for (w, b) in critics]
    for c in range(2):
        assert jnp.allclose(q_bf16[c], refs_bf16[c], atol=2e-3, rtol=2e-3)
        assert jnp.allclose(q_bf16[c], refs_f32[c], atol=1e-1, rtol=1e-1)

    # ---- padded-slab / bf16-output path (consumer indexes lane c directly) --
    fwd_padded = jax.jit(functools.partial(
        td3_critic_forward, meta=meta_f32, activation="relu",
        out_dtype=jnp.bfloat16, return_padded=True))
    slab = jax.block_until_ready(fwd_padded(state, action, arrays_f32))
    assert slab.shape == (8, 128) and slab.dtype == jnp.bfloat16
    for c in range(2):
        assert jnp.allclose(slab[:batch, c:c + 1].astype(jnp.float32),
                            refs_f32[c], atol=5e-2, rtol=5e-2)

    print("KERNEL_OK")
</pallas_src>

<mosaic_0001>
module attributes {stable_mosaic.version = 11 : i64} {
  func.func @kernel(%arg0: i32, %arg1: memref<8x20xf32, #tpu.memory_space<vmem>>, %arg2: memref<20x256xf32, #tpu.memory_space<vmem>>, %arg3: memref<256x256xf32, #tpu.memory_space<vmem>>, %arg4: memref<256x128xf32, #tpu.memory_space<vmem>>, %arg5: memref<3x256xf32, #tpu.memory_space<vmem>>, %arg6: memref<8x128xf32, #tpu.memory_space<vmem>>) attributes {dimension_semantics = [#tpu.dimension_semantics<parallel>], iteration_bounds = array<i64: 1>, scalar_prefetch = 0 : i64, scratch_operands = 0 : i64, tpu.core_type = #tpu.core_type<tc>, window_params = [{transform_indices = @transform_0, window_bounds = array<i64: 8, 20>}, {pipeline_mode = #tpu.pipeline_mode<synchronous>, transform_indices = @transform_1, window_bounds = array<i64: 20, 256>}, {pipeline_mode = #tpu.pipeline_mode<synchronous>, transform_indices = @transform_2, window_bounds = array<i64: 256, 256>}, {pipeline_mode = #tpu.pipeline_mode<synchronous>, transform_indices = @transform_3, window_bounds = array<i64: 256, 128>}, {pipeline_mode = #tpu.pipeline_mode<synchronous>, transform_indices = @transform_4, window_bounds = array<i64: 3, 256>}, {transform_indices = @transform_5, window_bounds = array<i64: 8, 128>}]} {
    %c0 = arith.constant 0 : index
    %c0_0 = arith.constant 0 : index
    %0 = vector.load %arg1[%c0, %c0_0] : memref<8x20xf32, #tpu.memory_space<vmem>>, vector<8x20xf32>
    %c0_1 = arith.constant 0 : index
    %c0_2 = arith.constant 0 : index
    %1 = vector.load %arg2[%c0_1, %c0_2] : memref<20x256xf32, #tpu.memory_space<vmem>>, vector<20x256xf32>
    %cst = arith.constant dense<0.000000e+00> : vector<8x256xf32>
    %2 = tpu.matmul %0, %1, %cst {dimension_numbers = #tpu.dot_dimension_numbers<[1], [0], [0], [1], [0, 0, 1, 1], [], []>} : vector<8x20xf32>, vector<20x256xf32>, vector<8x256xf32> -> vector<8x256xf32>
    %c0_3 = arith.constant 0 : index
    %c0_4 = arith.constant 0 : index
    %3 = vector.load %arg5[%c0_3, %c0_4] : memref<3x256xf32, #tpu.memory_space<vmem>>, vector<1x256xf32>
    %4 = vector.broadcast %3 : vector<1x256xf32> to vector<8x256xf32>
    %5 = arith.addf %2, %4 : vector<8x256xf32>
    %cst_5 = arith.constant 0.000000e+00 : f32
    %6 = vector.broadcast %cst_5 : f32 to vector<8x256xf32>
    %7 = arith.maximumf %5, %6 : vector<8x256xf32>
    %c0_6 = arith.constant 0 : index
    %c0_7 = arith.constant 0 : index
    %8 = vector.load %arg3[%c0_6, %c0_7] : memref<256x256xf32, #tpu.memory_space<vmem>>, vector<256x256xf32>
    %cst_8 = arith.constant dense<0.000000e+00> : vector<8x256xf32>
    %9 = tpu.matmul %7, %8, %cst_8 {dimension_numbers = #tpu.dot_dimension_numbers<[1], [0], [0], [1], [0, 0, 1, 1], [], []>} : vector<8x256xf32>, vector<256x256xf32>, vector<8x256xf32> -> vector<8x256xf32>
    %c1 = arith.constant 1 : index
    %c0_9 = arith.constant 0 : index
    %10 = vector.load %arg5[%c1, %c0_9] : memref<3x256xf32, #tpu.memory_space<vmem>>, vector<1x256xf32>
    %11 = vector.broadcast %10 : vector<1x256xf32> to vector<8x256xf32>
    %12 = arith.addf %9, %11 : vector<8x256xf32>
    %cst_10 = arith.constant 0.000000e+00 : f32
    %13 = vector.broadcast %cst_10 : f32 to vector<8x256xf32>
    %14 = arith.maximumf %12, %13 : vector<8x256xf32>
    %c0_11 = arith.constant 0 : index
    %c0_12 = arith.constant 0 : index
    %15 = vector.load %arg4[%c0_11, %c0_12] : memref<256x128xf32, #tpu.memory_space<vmem>>, vector<256x128xf32>
    %cst_13 = arith.constant dense<0.000000e+00> : vector<8x128xf32>
    %16 = tpu.matmul %14, %15, %cst_13 {dimension_numbers = #tpu.dot_dimension_numbers<[1], [0], [0], [1], [0, 0, 1, 1], [], []>} : vector<8x256xf32>, vector<256x128xf32>, vector<8x128xf32> -> vector<8x128xf32>
    %c2 = arith.constant 2 : index
    %c0_14 = arith.constant 0 : index
    %17 = vector.load %arg5[%c2, %c0_14] : memref<3x256xf32, #tpu.memory_space<vmem>>, vector<1x128xf32>
    %18 = vector.broadcast %17 : vector<1x128xf32> to vector<8x128xf32>
    %19 = arith.addf %16, %18 : vector<8x128xf32>
    %c0_15 = arith.constant 0 : index
    %c0_16 = arith.constant 0 : index
    %20 = vector.load %arg6[%c0_15, %c0_16] : memref<8x128xf32, #tpu.memory_space<vmem>>, vector<8x128xf32>
    tpu.vector_store %arg6[%c0_15, %c0_16], %19 {strides = array<i32>} : memref<8x128xf32, #tpu.memory_space<vmem>>, vector<8x128xf32>,
    return
  }
  func.func @transform_0(%arg0: i32) -> (i32, i32) {
    %c0_i32 = arith.constant 0 : i32
    %c0_i32_0 = arith.constant 0 : i32
    return %arg0, %c0_i32 : i32, i32
  }
  func.func @transform_1(%arg0: i32) -> (i32, i32) {
    %c0_i32 = arith.constant 0 : i32
    %c0_i32_0 = arith.constant 0 : i32
    %c0_i32_1 = arith.constant 0 : i32
    return %c0_i32, %c0_i32_0 : i32, i32
  }
  func.func @transform_2(%arg0: i32) -> (i32, i32) {
    %c0_i32 = arith.constant 0 : i32
    %c0_i32_0 = arith.constant 0 : i32
    %c0_i32_1 = arith.constant 0 : i32
    return %c0_i32, %c0_i32_0 : i32, i32
  }
  func.func @transform_3(%arg0: i32) -> (i32, i32) {
    %c0_i32 = arith.constant 0 : i32
    %c0_i32_0 = arith.constant 0 : i32
    %c0_i32_1 = arith.constant 0 : i32
    return %c0_i32, %c0_i32_0 : i32, i32
  }
  func.func @transform_4(%arg0: i32) -> (i32, i32) {
    %c0_i32 = arith.constant 0 : i32
    %c0_i32_0 = arith.constant 0 : i32
    %c0_i32_1 = arith.constant 0 : i32
    return %c0_i32, %c0_i32_0 : i32, i32
  }
  func.func @transform_5(%arg0: i32) -> (i32, i32) {
    %c0_i32 = arith.constant 0 : i32
    %c0_i32_0 = arith.constant 0 : i32
    return %arg0, %c0_i32 : i32, i32
  }
}

</mosaic_0001>

<llo_original>
// kernel: td3_critic_forward.1
$region0: #{td3_critic_forward.1}
  #allocation0 [shape = 'u32[]', space=smem, size = 0x4, offset = 0x4, fixed_abs, tag = 'smem constant byte address 0x4 - core index']
  #allocation1 [shape = 'u32[144,128]{1,0:T(1,128)}', space=vmem, size = 0x12000, scoped, tag = 'internal scratch']
  %s0 = inlined_call_operand.vmem [shape: f32[8,20], index: 0, kind: input, shape index: {}]
  %s1 = inlined_call_operand.hbm [shape: f32[20,256], index: 1, kind: input, shape index: {}]
  %s2 = inlined_call_operand.hbm [shape: f32[256,256], index: 2, kind: input, shape index: {}]
  %s3 = inlined_call_operand.hbm [shape: f32[256,128], index: 3, kind: input, shape index: {}]
  %s4 = inlined_call_operand.vmem [shape: f32[3,256], index: 4, kind: input, shape index: {}]
  %s5 = inlined_call_operand.vmem [shape: f32[8,128], index: 5, kind: output, shape index: {}]
  %s6 = sld [smem:[#allocation0]]
  $region42: #{td3_critic_forward.1} parent=0
    _
  %s8 = ssub.s32 1, %s6
  %s9 = scalar_select 0, %s8, %s6
  $region1: #{td3_critic_forward.1} parent=0
    #allocation2 [shape = 'u8[24576]{0}', space=vmem, size = 0x6000, scoped, tag = 'input window, operand 1, single buffered']
    #allocation3 [shape = 's32[1]{0}', space=sflag, size = 0x4, scoped, tag = 'scoped memory for td3_critic_forward.1']
    #allocation4 [shape = 'u8[262144]{0}', space=vmem, size = 0x40000, scoped, tag = 'input window, operand 2, single buffered']
    #allocation5 [shape = 's32[1]{0}', space=sflag, size = 0x4, scoped, tag = 'scoped memory for td3_critic_forward.1']
    #allocation6 [shape = 'u8[131072]{0}', space=vmem, size = 0x20000, scoped, tag = 'input window, operand 3, single buffered']
    %10 = vsyncpa [#allocation3], 0
    %11 = vsyncpa [#allocation5], 0
    // Predicated region
    $region2: #{td3_critic_forward.1} parent=1 // pred_check
      _
    $region3: #{td3_critic_forward.1} parent=1 // pred_check_branch
      %13 = sbr.rel (0) target = $region5
    $region4: #{td3_critic_forward.1} parent=1 // pred_region
      _
    $region5: #{td3_critic_forward.1} parent=1 // pred_fallthru
      _
    // Predicated region
    $region6: #{td3_critic_forward.1} parent=1 // pred_check
      _
    $region7: #{td3_critic_forward.1} parent=1 // pred_check_branch
      %15 = sbr.rel (0) target = $region9
    $region8: #{td3_critic_forward.1} parent=1 // pred_region
      %s17 = ssub.s32 768, 768
      %18 = vsyncadd [#allocation3], %s17
      %s19 = sshll.u32 [#allocation2], 4
      %s20 = int_to_ptr.vmem [resolvable:$true] %s19
      %25 = dma.hbm_to_vmem [thread:$0]  %s1, 768, %s20, [#allocation3], 256, 256, 16
    $region9: #{td3_critic_forward.1} parent=1 // pred_fallthru
      _
    // Predicated region
    $region10: #{td3_critic_forward.1} parent=1 // pred_check
      _
    $region11: #{td3_critic_forward.1} parent=1 // pred_check_branch
      %27 = sbr.rel (0) target = $region13
    $region12: #{td3_critic_forward.1} parent=1 // pred_region
      %s29 = ssub.s32 8192, 8192
      %30 = vsyncadd [#allocation5], %s29
      %s31 = sshll.u32 [#allocation4], 4
      %s32 = int_to_ptr.vmem [resolvable:$true] %s31
      %37 = dma.hbm_to_vmem [thread:$0]  %s2, 8192, %s32, [#allocation5], 256, 256, 16
    $region13: #{td3_critic_forward.1} parent=1 // pred_fallthru
      _
    // Predicated region
    $region14: #{td3_critic_forward.1} parent=1 // pred_check
      _
    $region15: #{td3_critic_forward.1} parent=1 // pred_check_branch
      %39 = sbr.rel (0) target = $region17
    $region16: #{td3_critic_forward.1} parent=1 // pred_region
      %s41 = ssub.s32 4096, 4096
      %42 = vsyncadd [#allocation5], %s41
      %s43 = sshll.u32 [#allocation6], 4
      %s44 = int_to_ptr.vmem [resolvable:$true] %s43
      %49 = dma.hbm_to_vmem [thread:$0]  %s3, 4096, %s44, [#allocation5], 128, 128, 8
    $region17: #{td3_critic_forward.1} parent=1 // pred_fallthru
      _
    // Predicated region
    $region18: #{td3_critic_forward.1} parent=1 // pred_check
      _
    $region19: #{td3_critic_forward.1} parent=1 // pred_check_branch
      %51 = sbr.rel (0) target = $region21
    $region20: #{td3_critic_forward.1} parent=1 // pred_region
      _
    $region21: #{td3_critic_forward.1} parent=1 // pred_fallthru
      _
    // Predicated region
    $region22: #{td3_critic_forward.1} parent=1 // pred_check
      _
    $region23: #{td3_critic_forward.1} parent=1 // pred_check_branch
      %53 = sbr.rel (0) target = $region25
    $region24: #{td3_critic_forward.1} parent=1 // pred_region
      %54 = dma.done [#allocation3], 768
    $region25: #{td3_critic_forward.1} parent=1 // pred_fallthru
      _
    // Predicated region
    $region26: #{td3_critic_forward.1} parent=1 // pred_check
      _
    $region27: #{td3_critic_forward.1} parent=1 // pred_check_branch
      %56 = sbr.rel (0) target = $region29
    $region28: #{td3_critic_forward.1} parent=1 // pred_region
      %57 = dma.done [#allocation5], 8192
    $region29: #{td3_critic_forward.1} parent=1 // pred_fallthru
      _
    // Predicated region
    $region30: #{td3_critic_forward.1} parent=1 // pred_check
      _
    $region31: #{td3_critic_forward.1} parent=1 // pred_check_branch
      %59 = sbr.rel (0) target = $region33
    $region32: #{td3_critic_forward.1} parent=1 // pred_region
      %60 = dma.done [#allocation5], 4096
    $region33: #{td3_critic_forward.1} parent=1 // pred_fallthru
      _
    %v61 = vld [vmem:[%s0] sm:$0xff]
    %v62 = vld [vmem:[#allocation2] sm:$0xff]
    %v63 = vld [vmem:[#allocation2 + $0x8] sm:$0xff]
    %v64 = vld [vmem:[#allocation2 + $0x10] sm:$0xff]
    %v65 = vld [vmem:[#allocation2 + $0x18] sm:$0xff]
    %v66 = vld [vmem:[#allocation2 + $0x20] sm:$0xf]
    %v67 = vld [vmem:[#allocation2 + $0x28] sm:$0xf]
    %v68 = vld [vmem:[%s4] ss:$4 sm:$0x3]
    %v70 = vlaneseq
    %v71 = vshrl.u32 %v70, 7
    %v72 = vsub.s32 0, %v71
    %v73 = vrot.slane %v68, %v72
    %v74 = vlaneseq
    %v75 = vshrl.u32 %v74, 7
    %v76 = vsub.s32 1, %v75
    %v77 = vrot.slane %v68, %v76
    %vm80 = vcmask 162816
    %v82 = vsel %vm80, %v61, 0
    %vm84 = vcmask 1043456
    %v86 = vsel %vm84, %v66, 0
    %v89 = vsel %vm84, %v67, 0
    %91 = vmatprep.subr.mxu0 %v63
    %92 = vmatpush1.msra.mxu0 %v62
    %93 = vmatprep.subr.mxu0 %v65
    %94 = vmatpush1.msra.mxu0 %v64
    %95 = vmatprep.subr.mxu0 %v89
    %96 = vmatpush1.msra.mxu0 %v86
    %97 = vmatprep.subr.mxu0 0.0
    %98 = vmatpush1.msra.mxu0 0.0
    %99 = vmatprep.subr.mxu0 0.0
    %100 = vmatpush1.msra.mxu0 0.0
    %101 = vmatprep.subr.mxu0 0.0
    %102 = vmatpush1.msra.mxu0 0.0
    %103 = vmatprep.subr.mxu0 0.0
    %104 = vmatpush1.msra.mxu0 0.0
    %105 = vmatprep.subr.mxu0 0.0
    %106 = vmatpush1.msra.mxu0 0.0
    %107 = vmatprep.subr.mxu0 0.0
    %108 = vmatpush1.msra.mxu0 0.0
    %109 = vmatprep.subr.mxu0 0.0
    %110 = vmatpush1.msra.mxu0 0.0
    %111 = vmatprep.subr.mxu0 0.0
    %112 = vmatpush1.msra.mxu0 0.0
    %113 = vmatprep.subr.mxu0 0.0
    %114 = vmatpush1.msra.mxu0 0.0
    %115 = vmatprep.subr.mxu0 0.0
    %116 = vmatpush1.msra.mxu0 0.0
    %117 = vmatprep.subr.mxu0 0.0
    %118 = vmatpush1.msra.mxu0 0.0
    %119 = vmatprep.subr.mxu0 0.0
    %120 = vmatpush1.msra.mxu0 0.0
    %121 = vmatprep.subr.mxu0 0.0
    %122 = vmatpush1.msra.mxu0 0.0
    %123 = vmatprep.subr.mxu0 0.0
    %124 = vmatpush1.msra.mxu0 0.0
    %125 = vmatprep.subr.mxu0 0.0
    %126 = vmatpush1.msra.mxu0 0.0
    %127 = vmatprep.subr.mxu0 0.0
    %128 = vmatpush1.msra.mxu0 0.0
    %129 = vmatprep.subr.mxu0 0.0
    %130 = vmatpush1.msra.mxu0 0.0
    %131 = vmatprep.subr.mxu0 0.0
    %132 = vmatpush1.msra.mxu0 0.0
    %133 = vmatprep.subr.mxu0 0.0
    %134 = vmatpush1.msra.mxu0 0.0
    %135 = vmatprep.subr.mxu0 0.0
    %136 = vmatpush1.msra.mxu0 0.0
    %137 = vmatprep.subr.mxu0 0.0
    %138 = vmatpush1.msra.mxu0 0.0
    %139 = vmatprep.subr.mxu0 0.0
    %140 = vmatpush1.msra.mxu0 0.0
    %141 = vmatprep.subr.mxu0 0.0
    %142 = vmatpush1.msra.mxu0 0.0
    %143 = vmatprep.subr.mxu0 0.0
    %144 = vmatpush1.msra.mxu0 0.0
    %145 = vmatprep.subr.mxu0 0.0
    %146 = vmatpush1.msra.mxu0 0.0
    %147 = vmatprep.subr.mxu0 0.0
    %148 = vmatpush1.msra.mxu0 0.0
    %149 = vmatprep.subr.mxu0 0.0
    %150 = vmatpush1.msra.mxu0 0.0
    %151 = vmatprep.subr.mxu0 0.0
    %152 = vmatpush1.msra.mxu0 0.0
    %153 = vmatprep.subr.mxu0 0.0
    %154 = vmatpush1.msra.mxu0 0.0
    %155 = vmatprep.mubr.f32.mxu0 0.0
    %156 = vmatmul.mubr.f32.gmra.mrb[0].mxu0 %v82
    %v157 = vpop.f32.mrb[0].mxu0
    %v158 = vadd.f32 %v73, %v157
    %v159 = vpop.f32.mrb[0].mxu0
    %v160 = vadd.f32 %v77, %v159
    %161 = vdwg.mxu0
    %v162 = vmax.f32 %v158, 0.0
    %v163 = vmax.f32 %v160, 0.0
    %v164 = vld [vmem:[#allocation4] sm:$0xff]
    %v165 = vld [vmem:[#allocation4 + $0x8] sm:$0xff]
    %v166 = vld [vmem:[#allocation4 + $0x10] sm:$0xff]
    %v167 = vld [vmem:[#allocation4 + $0x18] sm:$0xff]
    %v168 = vld [vmem:[#allocation4 + $0x20] sm:$0xff]
    %v169 = vld [vmem:[#allocation4 + $0x28] sm:$0xff]
    %v170 = vld [vmem:[#allocation4 + $0x30] sm:$0xff]
    %v171 = vld [vmem:[#allocation4 + $0x38] sm:$0xff]
    %v172 = vld [vmem:[#allocation4 + $0x40] sm:$0xff]
    %v173 = vld [vmem:[#allocation4 + $0x48] sm:$0xff]
    %v174 = vld [vmem:[#allocation4 + $0x50] sm:$0xff]
    %v175 = vld [vmem:[#allocation4 + $0x58] sm:$0xff]
    %v176 = vld [vmem:[#allocation4 + $0x60] sm:$0xff]
    %v177 = vld [vmem:[#allocation4 + $0x68] sm:$0xff]
    %v178 = vld [vmem:[#allocation4 + $0x70] sm:$0xff]
    %v179 = vld [vmem:[#allocation4 + $0x78] sm:$0xff]
    %v180 = vld [vmem:[#allocation4 + $0x80] sm:$0xff]
    %v181 = vld [vmem:[#allocation4 + $0x88] sm:$0xff]
    %v182 = vld [vmem:[#allocation4 + $0x90] sm:$0xff]
    %v183 = vld [vmem:[#allocation4 + $0x98] sm:$0xff]
    %v184 = vld [vmem:[#allocation4 + $0xa0] sm:$0xff]
    %v185 = vld [vmem:[#allocation4 + $0xa8] sm:$0xff]
    %v186 = vld [vmem:[#allocation4 + $0xb0] sm:$0xff]
    %v187 = vld [vmem:[#allocation4 + $0xb8] sm:$0xff]
    %v188 = vld [vmem:[#allocation4 + $0xc0] sm:$0xff]
    %v189 = vld [vmem:[#allocation4 + $0xc8] sm:$0xff]
    %v190 = vld [vmem:[#allocation4 + $0xd0] sm:$0xff]
    %v191 = vld [vmem:[#allocation4 + $0xd8] sm:$0xff]
    %v192 = vld [vmem:[#allocation4 + $0xe0] sm:$0xff]
    %v193 = vld [vmem:[#allocation4 + $0xe8] sm:$0xff]
    %v194 = vld [vmem:[#allocation4 + $0xf0] sm:$0xff]
    %v195 = vld [vmem:[#allocation4 + $0xf8] sm:$0xff]
    %v196 = vld [vmem:[#allocation4 + $0x100] sm:$0xff]
    %v197 = vld [vmem:[#allocation4 + $0x108] sm:$0xff]
    %v198 = vld [vmem:[#allocation4 + $0x110] sm:$0xff]
    %v199 = vld [vmem:[#allocation4 + $0x118] sm:$0xff]
    %v200 = vld [vmem:[#allocation4 + $0x120] sm:$0xff]
    %v201 = vld [vmem:[#allocation4 + $0x128] sm:$0xff]
    %v202 = vld [vmem:[#allocation4 + $0x130] sm:$0xff]
    %v203 = vld [vmem:[#allocation4 + $0x138] sm:$0xff]
    %v204 = vld [vmem:[#allocation4 + $0x140] sm:$0xff]
    %v205 = vld [vmem:[#allocation4 + $0x148] sm:$0xff]
    %v206 = vld [vmem:[#allocation4 + $0x150] sm:$0xff]
    %v207 = vld [vmem:[#allocation4 + $0x158] sm:$0xff]
    %v208 = vld [vmem:[#allocation4 + $0x160] sm:$0xff]
    %v209 = vld [vmem:[#allocation4 + $0x168] sm:$0xff]
    %v210 = vld [vmem:[#allocation4 + $0x170] sm:$0xff]
    %v211 = vld [vmem:[#allocation4 + $0x178] sm:$0xff]
    %v212 = vld [vmem:[#allocation4 + $0x180] sm:$0xff]
    %v213 = vld [vmem:[#allocation4 + $0x188] sm:$0xff]
    %v214 = vld [vmem:[#allocation4 + $0x190] sm:$0xff]
    %v215 = vld [vmem:[#allocation4 + $0x198] sm:$0xff]
    %v216 = vld [vmem:[#allocation4 + $0x1a0] sm:$0xff]
    %v217 = vld [vmem:[#allocation4 + $0x1a8] sm:$0xff]
    %v218 = vld [vmem:[#allocation4 + $0x1b0] sm:$0xff]
    %v219 = vld [vmem:[#allocation4 + $0x1b8] sm:$0xff]
    %v220 = vld [vmem:[#allocation4 + $0x1c0] sm:$0xff]
    %v221 = vld [vmem:[#allocation4 + $0x1c8] sm:$0xff]
    %v222 = vld [vmem:[#allocation4 + $0x1d0] sm:$0xff]
    %v223 = vld [vmem:[#allocation4 + $0x1d8] sm:$0xff]
    %v224 = vld [vmem:[#allocation4 + $0x1e0] sm:$0xff]
    %v225 = vld [vmem:[#allocation4 + $0x1e8] sm:$0xff]
    %v226 = vld [vmem:[#allocation4 + $0x1f0] sm:$0xff]
    %v227 = vld [vmem:[#allocation4 + $0x1f8] sm:$0xff]
    %s228 = scalar_lea.vmem %s4, 1
    %v229 = vld [vmem:[%s228] ss:$4 sm:$0x3]
    %v231 = vlaneseq
    %v232 = vshrl.u32 %v231, 7
    %v233 = vsub.s32 0, %v232
    %v234 = vrot.slane %v229, %v233
    %v235 = vlaneseq
    %v236 = vshrl.u32 %v235, 7
    %v237 = vsub.s32 1, %v236
    %v238 = vrot.slane %v229, %v237
    %241 = vmatprep.subr.mxu0 %v165
    %242 = vmatpush1.msra.mxu0 %v164
    %243 = vmatprep.subr.mxu0 %v167
    %244 = vmatpush1.msra.mxu0 %v166
    %245 = vmatprep.subr.mxu0 %v169
    %246 = vmatpush1.msra.mxu0 %v168
    %247 = vmatprep.subr.mxu0 %v171
    %248 = vmatpush1.msra.mxu0 %v170
    %249 = vmatprep.subr.mxu0 %v173
    %250 = vmatpush1.msra.mxu0 %v172
    %251 = vmatprep.subr.mxu0 %v175
    %252 = vmatpush1.msra.mxu0 %v174
    %253 = vmatprep.subr.mxu0 %v177
    %254 = vmatpush1.msra.mxu0 %v176
    %255 = vmatprep.subr.mxu0 %v179
    %256 = vmatpush1.msra.mxu0 %v178
    %257 = vmatprep.subr.mxu0 %v181
    %258 = vmatpush1.msra.mxu0 %v180
    %259 = vmatprep.subr.mxu0 %v183
    %260 = vmatpush1.msra.mxu0 %v182
    %261 = vmatprep.subr.mxu0 %v185
    %262 = vmatpush1.msra.mxu0 %v184
    %263 = vmatprep.subr.mxu0 %v187
    %264 = vmatpush1.msra.mxu0 %v186
    %265 = vmatprep.subr.mxu0 %v189
    %266 = vmatpush1.msra.mxu0 %v188
    %267 = vmatprep.subr.mxu0 %v191
    %268 = vmatpush1.msra.mxu0 %v190
    %269 = vmatprep.subr.mxu0 %v193
    %270 = vmatpush1.msra.mxu0 %v192
    %271 = vmatprep.subr.mxu0 %v195
    %272 = vmatpush1.msra.mxu0 %v194
    %273 = vmatprep.subr.mxu0 %v197
    %274 = vmatpush1.msra.mxu0 %v196
    %275 = vmatprep.subr.mxu0 %v199
    %276 = vmatpush1.msra.mxu0 %v198
    %277 = vmatprep.subr.mxu0 %v201
    %278 = vmatpush1.msra.mxu0 %v200
    %279 = vmatprep.subr.mxu0 %v203
    %280 = vmatpush1.msra.mxu0 %v202
    %281 = vmatprep.subr.mxu0 %v205
    %282 = vmatpush1.msra.mxu0 %v204
    %283 = vmatprep.subr.mxu0 %v207
    %284 = vmatpush1.msra.mxu0 %v206
    %285 = vmatprep.subr.mxu0 %v209
    %286 = vmatpush1.msra.mxu0 %v208
    %287 = vmatprep.subr.mxu0 %v211
    %288 = vmatpush1.msra.mxu0 %v210
    %289 = vmatprep.subr.mxu0 %v213
    %290 = vmatpush1.msra.mxu0 %v212
    %291 = vmatprep.subr.mxu0 %v215
    %292 = vmatpush1.msra.mxu0 %v214
    %293 = vmatprep.subr.mxu0 %v217
    %294 = vmatpush1.msra.mxu0 %v216
    %295 = vmatprep.subr.mxu0 %v219
    %296 = vmatpush1.msra.mxu0 %v218
    %297 = vmatprep.subr.mxu0 %v221
    %298 = vmatpush1.msra.mxu0 %v220
    %299 = vmatprep.subr.mxu0 %v223
    %300 = vmatpush1.msra.mxu0 %v222
    %301 = vmatprep.subr.mxu0 %v225
    %302 = vmatpush1.msra.mxu0 %v224
    %303 = vmatprep.subr.mxu0 %v227
    %304 = vmatpush1.msra.mxu0 %v226
    %305 = vmatprep.mubr.f32.mxu0 %v163
    %306 = vmatmul.mubr.f32.gmra.mrb[0].mxu0 %v162
    %v307 = vpop.f32.mrb[0].mxu0
    %v308 = vadd.f32 %v234, %v307
    %v309 = vpop.f32.mrb[0].mxu0
    %v310 = vadd.f32 %v238, %v309
    %311 = vdwg.mxu0
    %v312 = vmax.f32 %v308, 0.0
    %v313 = vmax.f32 %v310, 0.0
    %v314 = vld [vmem:[#allocation6] sm:$0xff]
    %v315 = vld [vmem:[#allocation6 + $0x8] sm:$0xff]
    %v316 = vld [vmem:[#allocation6 + $0x10] sm:$0xff]
    %v317 = vld [vmem:[#allocation6 + $0x18] sm:$0xff]
    %v318 = vld [vmem:[#allocation6 + $0x20] sm:$0xff]
    %v319 = vld [vmem:[#allocation6 + $0x28] sm:$0xff]
    %v320 = vld [vmem:[#allocation6 + $0x30] sm:$0xff]
    %v321 = vld [vmem:[#allocation6 + $0x38] sm:$0xff]
    %v322 = vld [vmem:[#allocation6 + $0x40] sm:$0xff]
    %v323 = vld [vmem:[#allocation6 + $0x48] sm:$0xff]
    %v324 = vld [vmem:[#allocation6 + $0x50] sm:$0xff]
    %v325 = vld [vmem:[#allocation6 + $0x58] sm:$0xff]
    %v326 = vld [vmem:[#allocation6 + $0x60] sm:$0xff]
    %v327 = vld [vmem:[#allocation6 + $0x68] sm:$0xff]
    %v328 = vld [vmem:[#allocation6 + $0x70] sm:$0xff]
    %v329 = vld [vmem:[#allocation6 + $0x78] sm:$0xff]
    %v330 = vld [vmem:[#allocation6 + $0x80] sm:$0xff]
    %v331 = vld [vmem:[#allocation6 + $0x88] sm:$0xff]
    %v332 = vld [vmem:[#allocation6 + $0x90] sm:$0xff]
    %v333 = vld [vmem:[#allocation6 + $0x98] sm:$0xff]
    %v334 = vld [vmem:[#allocation6 + $0xa0] sm:$0xff]
    %v335 = vld [vmem:[#allocation6 + $0xa8] sm:$0xff]
    %v336 = vld [vmem:[#allocation6 + $0xb0] sm:$0xff]
    %v337 = vld [vmem:[#allocation6 + $0xb8] sm:$0xff]
    %v338 = vld [vmem:[#allocation6 + $0xc0] sm:$0xff]
    %v339 = vld [vmem:[#allocation6 + $0xc8] sm:$0xff]
    %v340 = vld [vmem:[#allocation6 + $0xd0] sm:$0xff]
    %v341 = vld [vmem:[#allocation6 + $0xd8] sm:$0xff]
    %v342 = vld [vmem:[#allocation6 + $0xe0] sm:$0xff]
    %v343 = vld [vmem:[#allocation6 + $0xe8] sm:$0xff]
    %v344 = vld [vmem:[#allocation6 + $0xf0] sm:$0xff]
    %v345 = vld [vmem:[#allocation6 + $0xf8] sm:$0xff]
    %v346 = vld [vmem:[%s4 + $0x2] sm:$0x1]
    %v347 = vlaneseq
    %v348 = vshrl.u32 %v347, 7
    %v349 = vsub.s32 0, %v348
    %v350 = vrot.slane %v346, %v349
    %351 = vmatprep.subr.mxu0 0.0
    %352 = vmatpush1.msra.mxu0 %v314
    %353 = vmatprep.subr.mxu0 0.0
    %354 = vmatpush1.msra.mxu0 %v315
    %355 = vmatprep.subr.mxu0 0.0
    %356 = vmatpush1.msra.mxu0 %v316
    %357 = vmatprep.subr.mxu0 0.0
    %358 = vmatpush1.msra.mxu0 %v317
    %359 = vmatprep.subr.mxu0 0.0
    %360 = vmatpush1.msra.mxu0 %v318
    %361 = vmatprep.subr.mxu0 0.0
    %362 = vmatpush1.msra.mxu0 %v319
    %363 = vmatprep.subr.mxu0 0.0
    %364 = vmatpush1.msra.mxu0 %v320
    %365 = vmatprep.subr.mxu0 0.0
    %366 = vmatpush1.msra.mxu0 %v321
    %367 = vmatprep.subr.mxu0 0.0
    %368 = vmatpush1.msra.mxu0 %v322
    %369 = vmatprep.subr.mxu0 0.0
    %370 = vmatpush1.msra.mxu0 %v323
    %371 = vmatprep.subr.mxu0 0.0
    %372 = vmatpush1.msra.mxu0 %v324
    %373 = vmatprep.subr.mxu0 0.0
    %374 = vmatpush1.msra.mxu0 %v325
    %375 = vmatprep.subr.mxu0 0.0
    %376 = vmatpush1.msra.mxu0 %v326
    %377 = vmatprep.subr.mxu0 0.0
    %378 = vmatpush1.msra.mxu0 %v327
    %379 = vmatprep.subr.mxu0 0.0
    %380 = vmatpush1.msra.mxu0 %v328
    %381 = vmatprep.subr.mxu0 0.0
    %382 = vmatpush1.msra.mxu0 %v329
    %383 = vmatprep.subr.mxu0 0.0
    %384 = vmatpush1.msra.mxu0 %v330
    %385 = vmatprep.subr.mxu0 0.0
    %386 = vmatpush1.msra.mxu0 %v331
    %387 = vmatprep.subr.mxu0 0.0
    %388 = vmatpush1.msra.mxu0 %v332
    %389 = vmatprep.subr.mxu0 0.0
    %390 = vmatpush1.msra.mxu0 %v333
    %391 = vmatprep.subr.mxu0 0.0
    %392 = vmatpush1.msra.mxu0 %v334
    %393 = vmatprep.subr.mxu0 0.0
    %394 = vmatpush1.msra.mxu0 %v335
    %395 = vmatprep.subr.mxu0 0.0
    %396 = vmatpush1.msra.mxu0 %v336
    %397 = vmatprep.subr.mxu0 0.0
    %398 = vmatpush1.msra.mxu0 %v337
    %399 = vmatprep.subr.mxu0 0.0
    %400 = vmatpush1.msra.mxu0 %v338
    %401 = vmatprep.subr.mxu0 0.0
    %402 = vmatpush1.msra.mxu0 %v339
    %403 = vmatprep.subr.mxu0 0.0
    %404 = vmatpush1.msra.mxu0 %v340
    %405 = vmatprep.subr.mxu0 0.0
    %406 = vmatpush1.msra.mxu0 %v341
    %407 = vmatprep.subr.mxu0 0.0
    %408 = vmatpush1.msra.mxu0 %v342
    %409 = vmatprep.subr.mxu0 0.0
    %410 = vmatpush1.msra.mxu0 %v343
    %411 = vmatprep.subr.mxu0 0.0
    %412 = vmatpush1.msra.mxu0 %v344
    %413 = vmatprep.subr.mxu0 0.0
    %414 = vmatpush1.msra.mxu0 %v345
    %415 = vmatprep.mubr.f32.mxu0 %v313
    %416 = vmatmul.mubr.f32.gmra.mrb[0].mxu0 %v312
    %v417 = vpop.f32.mrb[0].mxu0
    %v418 = vadd.f32 %v350, %v417
    %v419 = vpop.f32.mrb[0].mxu0
    %420 = vdwg.mxu0
    %421 = vst [vmem:[%s5] sm:$0xff] %v418
    // Predicated region
    $region34: #{td3_critic_forward.1} parent=1 // pred_check
      _
    $region35: #{td3_critic_forward.1} parent=1 // pred_check_branch
      %423 = sbr.rel (0) target = $region37
    $region36: #{td3_critic_forward.1} parent=1 // pred_region
      _
    $region37: #{td3_critic_forward.1} parent=1 // pred_fallthru
      _
    // Predicated region
    $region38: #{td3_critic_forward.1} parent=1 // pred_check
      _
    $region39: #{td3_critic_forward.1} parent=1 // pred_check_branch
      %425 = sbr.rel (0) target = $region41
    $region40: #{td3_critic_forward.1} parent=1 // pred_region
      _
    $region41: #{td3_critic_forward.1} parent=1 // pred_fallthru
      _
    %426 = vsyncpa [#allocation3], 1
    %427 = vsyncpa [#allocation5], 1

</llo_original>
